<compile_context>
chip_gen: v6e
topology: v6e:2x2x1
jax: 0.10.0
libtpu: 0.0.40
codegen_flags: <defaults>
</compile_context>

<pallas_src>
import jax
import jax.numpy as jnp
from jax.experimental import pallas as pl
from jax.experimental.pallas import tpu as pltpu


def _identity_kernel(x_ref, o_ref):
    # The entire "hot path" of Net24.forward: an elementwise copy.
    o_ref[...] = x_ref[...]


def _device_kind() -> str:
    try:
        return jax.devices()[0].device_kind.lower()
    except Exception:
        return ""


def _choose_2d_shape(shape):
    """Pick a lane-dense (rows, cols) factorization of the flattened array.

    rows * cols == prod(shape) exactly, so no padding is ever introduced.
    """
    n = 1
    for d in shape:
        n *= d
    # Prefer cols that are a multiple of 128 (full-width vst, no masked lanes)
    # while keeping at least 8 rows (full sublanes per vreg).
    for c in (2048, 1024, 512, 256, 128):
        if n % c == 0 and (n // c) >= 8:
            return n // c, c
    for c in (2048, 1024, 512, 256, 128):
        if n % c == 0:
            return n // c, c
    # Fallback: fold trailing dims of the original shape until the lane axis
    # is >= 128 if possible; cdiv grid + masked edge blocks handle the rest.
    c = 1
    dims = list(shape)
    while dims and c < 128:
        c *= dims.pop()
    r = 1
    for d in dims:
        r *= d
    return r, c


def _choose_tiles(r, c, itemsize, tile_budget_bytes):
    """Pick (tr, tc) block shape: big (amortizes ~0.35us/step) but VMEM-safe."""
    # Lane tile: multiple of 128, up to 2048 lanes; full extent if c < 128.
    if c >= 128:
        tc = min((c // 128) * 128, 2048)
    else:
        tc = c  # equal to the full array dim -> legal block shape
    if tc > c:
        tc = c
    # Row tile: multiple of 8, sized so one buffer fits the per-buffer budget.
    max_tr = max(8, (tile_budget_bytes // max(tc * itemsize, 1)) // 8 * 8)
    if max_tr >= r:
        tr = r  # full extent: legal regardless of divisibility by 8
    else:
        tr = max_tr  # multiple of 8; cdiv grid masks the ragged edge block
    return tr, tc


def net24_forward(x):
    """Identity forward pass (Net24.forward) as a Pallas TPU copy kernel."""
    n = x.size
    # Degenerate / sub-tile inputs: a kernel launch is pure fixed overhead.
    if n == 0 or n < 8 * 128:
        return x

    orig_shape = x.shape
    itemsize = jnp.dtype(x.dtype).itemsize

    r, c = _choose_2d_shape(orig_shape)
    x2 = x.reshape(r, c)  # exact: r * c == n, no padding, no extra HBM pass

    kind = _device_kind()
    if "v6" in kind:
        # v6e: 128 MiB VMEM, ~1.4 TB/s HBM -> large tiles reach ~85% roofline.
        tile_budget = 8 * 1024 * 1024
        vmem_limit = 64 * 1024 * 1024
    else:
        # v5e (16 MiB scoped default) and v7x (64 MiB physical VMEM): cap each
        # buffer at ~4 MiB so double-buffered in+out (4 buffers) stays safe.
        tile_budget = 4 * 1024 * 1024
        vmem_limit = 32 * 1024 * 1024

    tr, tc = _choose_tiles(r, c, itemsize, tile_budget)
    grid = (pl.cdiv(r, tr), pl.cdiv(c, tc))  # edge blocks are masked; no pad

    out = pl.pallas_call(
        _identity_kernel,
        out_shape=jax.ShapeDtypeStruct((r, c), x.dtype),
        grid_spec=pltpu.PrefetchScalarGridSpec(
            num_scalar_prefetch=0,
            grid=grid,
            in_specs=[pl.BlockSpec((tr, tc), lambda i, j: (i, j))],
            out_specs=pl.BlockSpec((tr, tc), lambda i, j: (i, j)),
        ),
        compiler_params=pltpu.CompilerParams(
            dimension_semantics=("parallel", "parallel"),
            vmem_limit_bytes=vmem_limit,
        ),
        cost_estimate=pl.CostEstimate(
            flops=0, transcendentals=0, bytes_accessed=2 * n * itemsize
        ),
        # TODO(synk): under a jit boundary with buffer donation,
        # input_output_aliases={0: 0} would drop the fresh output allocation
        # entirely for this identity op; omitted here (eager, non-donated
        # input) to keep the standalone script's behavior predictable.
    )(x2)

    return out.reshape(orig_shape)


if __name__ == "__main__":
    key = jax.random.PRNGKey(0)
    # Small NCHW input consistent with a conv-style module interface.
    x = jax.random.normal(key, (2, 4, 16, 16), dtype=jnp.float32)

    y = net24_forward(x)
    y = jax.block_until_ready(y)

    # Verify identity semantics exactly.
    assert y.shape == x.shape
    assert y.dtype == x.dtype
    assert bool(jnp.all(y == x))

    print("KERNEL_OK")
</pallas_src>

<mosaic_0001>
module attributes {stable_mosaic.version = 11 : i64} {
  func.func @_identity_kernel(%arg0: i32, %arg1: i32, %arg2: memref<8x256xf32, #tpu.memory_space<vmem>>, %arg3: memref<8x256xf32, #tpu.memory_space<vmem>>) attributes {dimension_semantics = [#tpu.dimension_semantics<parallel>, #tpu.dimension_semantics<parallel>], iteration_bounds = array<i64: 1, 1>, scalar_prefetch = 0 : i64, scratch_operands = 0 : i64, tpu.core_type = #tpu.core_type<tc>, window_params = [{transform_indices = @transform_0, window_bounds = array<i64: 8, 256>}, {transform_indices = @transform_1, window_bounds = array<i64: 8, 256>}]} {
    %c0 = arith.constant 0 : index
    %c0_0 = arith.constant 0 : index
    %0 = vector.load %arg2[%c0, %c0_0] : memref<8x256xf32, #tpu.memory_space<vmem>>, vector<8x256xf32>
    %c0_1 = arith.constant 0 : index
    %c0_2 = arith.constant 0 : index
    %1 = vector.load %arg3[%c0_1, %c0_2] : memref<8x256xf32, #tpu.memory_space<vmem>>, vector<8x256xf32>
    tpu.vector_store %arg3[%c0_1, %c0_2], %0 {strides = array<i32>} : memref<8x256xf32, #tpu.memory_space<vmem>>, vector<8x256xf32>,
    return
  }
  func.func @transform_0(%arg0: i32, %arg1: i32) -> (i32, i32) {
    %c0_i32 = arith.constant 0 : i32
    return %arg0, %arg1 : i32, i32
  }
  func.func @transform_1(%arg0: i32, %arg1: i32) -> (i32, i32) {
    %c0_i32 = arith.constant 0 : i32
    return %arg0, %arg1 : i32, i32
  }
}

</mosaic_0001>

<llo_original>
// kernel: tpu_custom_call.1
$region0: #{tpu_custom_call.1}
  #allocation0 [shape = 'u32[]', space=smem, size = 0x4, offset = 0x4, fixed_abs, tag = 'smem constant byte address 0x4 - core index']
  #allocation1 [shape = 'u32[144,128]{1,0:T(1,128)}', space=vmem, size = 0x12000, scoped, tag = 'internal scratch']
  %s0 = inlined_call_operand.hbm [shape: f32[8,256], index: 0, kind: input, shape index: {}]
  %s1 = inlined_call_operand.hbm [shape: f32[8,256], index: 1, kind: output, shape index: {}]
  %s2 = sld [smem:[#allocation0]]
  $region18: #{tpu_custom_call.1} parent=0
    _
  %s4 = ssub.s32 1, %s2
  %s5 = scalar_select 0, %s4, %s2
  $region1: #{tpu_custom_call.1} parent=0
    #allocation2 [shape = 'u8[8192]{0}', space=vmem, size = 0x2000, scoped, tag = 'input window, operand 0, single buffered']
    #allocation3 [shape = 's32[1]{0}', space=sflag, size = 0x4, scoped, tag = 'scoped memory for tpu_custom_call.1']
    #allocation4 [shape = 's32[1]{0}', space=sflag, size = 0x4, scoped, tag = 'scoped memory for tpu_custom_call.1']
    #allocation5 [shape = 'u8[8192]{0}', space=vmem, size = 0x2000, scoped, tag = 'output window, operand 0, single buffered']
    %6 = vsyncpa [#allocation3], 0
    %7 = vsyncpa [#allocation4], 0
    // Predicated region
    $region2: #{tpu_custom_call.1} parent=1 // pred_check
      _
    $region3: #{tpu_custom_call.1} parent=1 // pred_check_branch
      %9 = sbr.rel (0) target = $region5
    $region4: #{tpu_custom_call.1} parent=1 // pred_region
      %s11 = ssub.s32 256, 256
      %12 = vsyncadd [#allocation3], %s11
      %s14 = sshll.u32 [#allocation2], 4
      %s15 = int_to_ptr.vmem [resolvable:$true] %s14
      %17 = dma.hbm_to_vmem [thread:$0]  %s0, 256, %s15, [#allocation3]
    $region5: #{tpu_custom_call.1} parent=1 // pred_fallthru
      _
    // Predicated region
    $region6: #{tpu_custom_call.1} parent=1 // pred_check
      _
    $region7: #{tpu_custom_call.1} parent=1 // pred_check_branch
      %19 = sbr.rel (0) target = $region9
    $region8: #{tpu_custom_call.1} parent=1 // pred_region
      %20 = dma.done [#allocation3], 256
    $region9: #{tpu_custom_call.1} parent=1 // pred_fallthru
      _
    %v21 = vld [vmem:[#allocation2] sm:$0xff]
    %v22 = vld [vmem:[#allocation2 + $0x8] sm:$0xff]
    %23 = vst [vmem:[#allocation5] sm:$0xff] %v21
    %24 = vst [vmem:[#allocation5 + $0x8] sm:$0xff] %v22
    // Predicated region
    $region10: #{tpu_custom_call.1} parent=1 // pred_check
      _
    $region11: #{tpu_custom_call.1} parent=1 // pred_check_branch
      %26 = sbr.rel (0) target = $region13
    $region12: #{tpu_custom_call.1} parent=1 // pred_region
      %s28 = ssub.s32 256, 256
      %29 = vsyncadd [#allocation4], %s28
      %s31 = sshll.u32 [#allocation5], 4
      %s32 = int_to_ptr.vmem [resolvable:$true] %s31
      %34 = dma.vmem_to_hbm [thread:$0]  %s32, 256, %s1, [#allocation4]
    $region13: #{tpu_custom_call.1} parent=1 // pred_fallthru
      _
    // Predicated region
    $region14: #{tpu_custom_call.1} parent=1 // pred_check
      _
    $region15: #{tpu_custom_call.1} parent=1 // pred_check_branch
      %36 = sbr.rel (0) target = $region17
    $region16: #{tpu_custom_call.1} parent=1 // pred_region
      %37 = dma.done [#allocation4], 256
    $region17: #{tpu_custom_call.1} parent=1 // pred_fallthru
      _
    %38 = vsyncpa [#allocation3], 1
    %39 = vsyncpa [#allocation4], 1

</llo_original>
